<compile_context>
chip_gen: v5e
topology: v5e:2x2
jax: 0.10.0
libtpu: 0.0.40
codegen_flags: <defaults>
</compile_context>

<pallas_src>
import functools
import math

import jax
import jax.numpy as jnp
from jax.experimental import pallas as pl
from jax.experimental.pallas import tpu as pltpu

BN_EPS = 1e-5
MUL = 4  # BottleNeck.mul


# --------------------------------------------------------------------------- #
# Stage kernels
# --------------------------------------------------------------------------- #

def _stage1_kernel(*refs, has_projection):
    """conv1 (1x1) [+ projection 1x1 conv] on one M-tile + BN partial stats."""
    if has_projection:
        x_ref, w1_ref, wsc_ref, y1_ref, ysc_ref, st1_ref, stsc_ref = refs
    else:
        x_ref, w1_ref, y1_ref, st1_ref = refs

    x = x_ref[...]                                              # (tm, Cin) bf16
    y1 = jnp.dot(x, w1_ref[...], preferred_element_type=jnp.float32)
    y1_ref[...] = y1.astype(y1_ref.dtype)
    s = jnp.sum(y1, axis=0, keepdims=True)
    ss = jnp.sum(y1 * y1, axis=0, keepdims=True)
    st1_ref[...] = jnp.concatenate([s, ss], axis=0)[None]       # (1, 2, C1)

    if has_projection:
        ysc = jnp.dot(x, wsc_ref[...], preferred_element_type=jnp.float32)
        ysc_ref[...] = ysc.astype(ysc_ref.dtype)
        s = jnp.sum(ysc, axis=0, keepdims=True)
        ss = jnp.sum(ysc * ysc, axis=0, keepdims=True)
        stsc_ref[...] = jnp.concatenate([s, ss], axis=0)[None]


def _stage2_kernel(y1_ref, sc1_ref, sh1_ref, w2_ref, y2_ref, st2_ref):
    """Per image: folded bn1 + relu, 3x3 conv (pad 1) as 3 accumulating row-grouped
    tap matmuls (K = 3*C1, activations duplicated 3x not 9x), bn2 partial stats."""
    _, H, W, C1 = y1_ref.shape
    scale1 = sc1_ref[...].reshape(1, 1, C1)
    shift1 = sh1_ref[...].reshape(1, 1, C1)
    a = jnp.maximum(y1_ref[0].astype(jnp.float32) * scale1 + shift1, 0.0)
    ab = a.astype(y1_ref.dtype)                                 # bf16 BEFORE pad/slice
    zrow = jnp.zeros((1, W, C1), ab.dtype)
    zcol = jnp.zeros((H + 2, 1, C1), ab.dtype)
    ap = jnp.concatenate([zrow, ab, zrow], axis=0)              # (H+2, W,   C1)
    ap = jnp.concatenate([zcol, ap, zcol], axis=1)              # (H+2, W+2, C1)

    acc = jnp.zeros((H * W, C1), jnp.float32)
    for dy in range(3):                                          # 3 accumulating dots
        rows = ap[dy:dy + H]                                     # (H, W+2, C1)
        cols = jnp.concatenate(
            [rows[:, 0:W], rows[:, 1:W + 1], rows[:, 2:W + 2]], axis=-1)
        cols = cols.reshape(H * W, 3 * C1)
        wblk = w2_ref[dy * 3 * C1:(dy + 1) * 3 * C1, :]
        acc = acc + jnp.dot(cols, wblk, preferred_element_type=jnp.float32)

    y2_ref[...] = acc.astype(y2_ref.dtype)
    s = jnp.sum(acc, axis=0, keepdims=True)
    ss = jnp.sum(acc * acc, axis=0, keepdims=True)
    st2_ref[...] = jnp.concatenate([s, ss], axis=0)[None]


def _stage3_kernel(y2_ref, sc2_ref, sh2_ref, w3_ref, y3_ref, st3_ref):
    """Per M-tile: folded bn2 + relu, conv3 (1x1), bn3 partial stats."""
    a = jnp.maximum(y2_ref[...].astype(jnp.float32) * sc2_ref[...] + sh2_ref[...], 0.0)
    y3 = jnp.dot(a.astype(w3_ref.dtype), w3_ref[...],
                 preferred_element_type=jnp.float32)
    y3_ref[...] = y3.astype(y3_ref.dtype)
    s = jnp.sum(y3, axis=0, keepdims=True)
    ss = jnp.sum(y3 * y3, axis=0, keepdims=True)
    st3_ref[...] = jnp.concatenate([s, ss], axis=0)[None]


def _stage4_kernel(*refs, has_projection):
    """Per lane-dense tile: bn3 (+ bn_sc) + residual add + relu, bf16 output."""
    if has_projection:
        y3_ref, sc_ref, s3_ref, h3_ref, ssc_ref, hsc_ref, out_ref = refs
    else:
        y3_ref, sc_ref, s3_ref, h3_ref, out_ref = refs
    o = y3_ref[...].astype(jnp.float32) * s3_ref[...] + h3_ref[...]
    sc = sc_ref[...].astype(jnp.float32)
    if has_projection:
        sc = sc * ssc_ref[...] + hsc_ref[...]
    out_ref[...] = jnp.maximum(o + sc, 0.0).astype(out_ref.dtype)


# --------------------------------------------------------------------------- #
# Wrapper / glue
# --------------------------------------------------------------------------- #

def _cparams():
    # Conservative VMEM cap works on every generation (v7x scoped default is 32 MiB);
    # "parallel" lets v7x shard the grid across its two TensorCores.
    return pltpu.CompilerParams(dimension_semantics=("parallel",),
                                vmem_limit_bytes=32 * 1024 * 1024)


def _pick_tile_rows(M, W, max_rows=1024):
    """Largest tile of rows that divides M, is a multiple of 8*W (keeps both the
    (tm, C) and the lane-dense (tm//W, W*C3) views 8-sublane aligned) and leaves a
    grid of at least 2 steps when possible."""
    step = 8 * W
    limit = min(max_rows, M // 2) if M >= 2 * step else M
    best, t = None, step
    while t <= limit:
        if M % t == 0:
            best = t
        t += step
    return best if best is not None else M


def _bn_scale_shift(partials, count, gamma, beta):
    """Reduce per-tile (sum, sumsq) partials to a folded BN scale/shift (f32)."""
    s = jnp.sum(partials[:, 0, :], axis=0)
    ss = jnp.sum(partials[:, 1, :], axis=0)
    mean = s / count
    var = jnp.maximum(ss / count - mean * mean, 0.0)   # single-pass, guarded
    scale = gamma.reshape(-1) * jax.lax.rsqrt(var + BN_EPS)
    shift = beta.reshape(-1) - mean * scale
    return scale.reshape(1, -1), shift.reshape(1, -1)


def init_params(key, in_ch, out_ch, stride=1):
    """Synthetic parameters in kernel-friendly (channels-last) layouts.
    Conv biases are intentionally absent: every conv is immediately followed by a
    training-mode BatchNorm whose mean subtraction cancels any per-channel constant,
    so biases are mathematically dead in this block's forward pass."""
    c3 = out_ch * MUL
    ks = jax.random.split(key, 4)

    def w(k, shape, fan_in):
        return jax.random.normal(k, shape, jnp.float32) / jnp.sqrt(float(fan_in))

    params = dict(
        w1=w(ks[0], (in_ch, out_ch), in_ch),
        g1=jnp.ones((1, out_ch), jnp.float32),
        be1=jnp.zeros((1, out_ch), jnp.float32),
        w2=w(ks[1], (9, out_ch, out_ch), 9 * out_ch),   # tap = dy*3+dx, (Cin, Cout)
        g2=jnp.ones((1, out_ch), jnp.float32),
        be2=jnp.zeros((1, out_ch), jnp.float32),
        w3=w(ks[2], (out_ch, c3), out_ch),
        g3=jnp.ones((1, c3), jnp.float32),
        be3=jnp.zeros((1, c3), jnp.float32),
    )
    has_projection = (stride != 1) or (in_ch != c3)
    if has_projection:
        params.update(
            wsc=w(ks[3], (in_ch, c3), in_ch),
            gsc=jnp.ones((1, c3), jnp.float32),
            besc=jnp.zeros((1, c3), jnp.float32),
        )
    return params, has_projection


def bottleneck_forward_nhwc(x_nhwc, params, stride, has_projection,
                            compute_dtype=jnp.bfloat16):
    """NHWC in -> NHWC bf16 out (the inter-block interface when chaining blocks)."""
    f32 = jnp.float32
    cdt = compute_dtype
    x = x_nhwc
    if stride != 1:                       # 1x1 conv with stride == subsample then 1x1
        x = x[:, ::stride, ::stride, :]
    N, H, W, Cin = x.shape
    C1 = params["w1"].shape[1]
    C3 = params["w3"].shape[1]
    M = N * H * W

    x2d = x.reshape(M, Cin).astype(cdt)
    w1 = params["w1"].astype(cdt)
    w2 = params["w2"].reshape(9 * C1, C1).astype(cdt)
    w3 = params["w3"].astype(cdt)

    tm = _pick_tile_rows(M, W)
    T = M // tm

    # ---- stage 1: conv1 (+ projection conv) + bn1/bn_sc partial stats ----------
    in_specs1 = [pl.BlockSpec((tm, Cin), lambda i: (i, 0)),
                 pl.BlockSpec((Cin, C1), lambda i: (0, 0))]
    out_shape1 = [jax.ShapeDtypeStruct((M, C1), cdt),
                  jax.ShapeDtypeStruct((T, 2, C1), f32)]
    out_specs1 = [pl.BlockSpec((tm, C1), lambda i: (i, 0)),
                  pl.BlockSpec((1, 2, C1), lambda i: (i, 0, 0))]
    args1 = [x2d, w1]
    if has_projection:
        in_specs1.append(pl.BlockSpec((Cin, C3), lambda i: (0, 0)))
        out_shape1 = [out_shape1[0],
                      jax.ShapeDtypeStruct((M, C3), cdt),
                      out_shape1[1],
                      jax.ShapeDtypeStruct((T, 2, C3), f32)]
        out_specs1 = [out_specs1[0],
                      pl.BlockSpec((tm, C3), lambda i: (i, 0)),
                      out_specs1[1],
                      pl.BlockSpec((1, 2, C3), lambda i: (i, 0, 0))]
        args1.append(params["wsc"].astype(cdt))
    res1 = pl.pallas_call(
        functools.partial(_stage1_kernel, has_projection=has_projection),
        grid=(T,), in_specs=in_specs1,
        out_shape=tuple(out_shape1), out_specs=tuple(out_specs1),
        compiler_params=_cparams())(*args1)
    if has_projection:
        y1, ysc, st1, stsc = res1
    else:
        y1, st1 = res1
        ysc = None
    scale1, shift1 = _bn_scale_shift(st1, M, params["g1"], params["be1"])

    # ---- stage 2: bn1+relu fold + 3x3 conv + bn2 partial stats ------------------
    y1_img = y1.reshape(N, H, W, C1)
    y2, st2 = pl.pallas_call(
        _stage2_kernel,
        grid=(N,),
        in_specs=[pl.BlockSpec((1, H, W, C1), lambda n: (n, 0, 0, 0)),
                  pl.BlockSpec((1, C1), lambda n: (0, 0)),
                  pl.BlockSpec((1, C1), lambda n: (0, 0)),
                  pl.BlockSpec((9 * C1, C1), lambda n: (0, 0))],
        out_shape=(jax.ShapeDtypeStruct((M, C1), cdt),
                   jax.ShapeDtypeStruct((N, 2, C1), f32)),
        out_specs=(pl.BlockSpec((H * W, C1), lambda n: (n, 0)),
                   pl.BlockSpec((1, 2, C1), lambda n: (n, 0, 0))),
        compiler_params=_cparams())(y1_img, scale1, shift1, w2)
    scale2, shift2 = _bn_scale_shift(st2, M, params["g2"], params["be2"])

    # ---- stage 3: bn2+relu fold + conv3 + bn3 partial stats ---------------------
    y3, st3 = pl.pallas_call(
        _stage3_kernel,
        grid=(T,),
        in_specs=[pl.BlockSpec((tm, C1), lambda i: (i, 0)),
                  pl.BlockSpec((1, C1), lambda i: (0, 0)),
                  pl.BlockSpec((1, C1), lambda i: (0, 0)),
                  pl.BlockSpec((C1, C3), lambda i: (0, 0))],
        out_shape=(jax.ShapeDtypeStruct((M, C3), cdt),
                   jax.ShapeDtypeStruct((T, 2, C3), f32)),
        out_specs=(pl.BlockSpec((tm, C3), lambda i: (i, 0)),
                   pl.BlockSpec((1, 2, C3), lambda i: (i, 0, 0))),
        compiler_params=_cparams())(y2, scale2, shift2, w3)
    scale3, shift3 = _bn_scale_shift(st3, M, params["g3"], params["be3"])

    # ---- stage 4: bn3 (+ bn_sc) + residual + relu, lane-dense bf16 output -------
    rows, trows = M // W, tm // W                     # lane-dense view: (N*H, W*C3)
    y3_ld = y3.reshape(rows, W * C3)
    if has_projection:
        scalesc, shiftsc = _bn_scale_shift(stsc, M, params["gsc"], params["besc"])
        sc_ld = ysc.reshape(rows, W * C3)
    else:
        sc_ld = x2d.reshape(rows, W * C3)             # identity: Cin == C3
    args4 = [y3_ld, sc_ld, jnp.tile(scale3, (1, W)), jnp.tile(shift3, (1, W))]
    in_specs4 = [pl.BlockSpec((trows, W * C3), lambda i: (i, 0)),
                 pl.BlockSpec((trows, W * C3), lambda i: (i, 0)),
                 pl.BlockSpec((1, W * C3), lambda i: (0, 0)),
                 pl.BlockSpec((1, W * C3), lambda i: (0, 0))]
    if has_projection:
        args4 += [jnp.tile(scalesc, (1, W)), jnp.tile(shiftsc, (1, W))]
        in_specs4 += [pl.BlockSpec((1, W * C3), lambda i: (0, 0)),
                      pl.BlockSpec((1, W * C3), lambda i: (0, 0))]
    out_ld = pl.pallas_call(
        functools.partial(_stage4_kernel, has_projection=has_projection),
        grid=(T,), in_specs=in_specs4,
        out_shape=jax.ShapeDtypeStruct((rows, W * C3), cdt),
        out_specs=pl.BlockSpec((trows, W * C3), lambda i: (i, 0)),
        compiler_params=_cparams())(*args4)
    return out_ld.reshape(N, H, W, C3)


def bottleneck_forward(x_nchw, params, stride, has_projection,
                       compute_dtype=jnp.bfloat16):
    """PyTorch-style NCHW/f32 boundary wrapper (layout conversion only here)."""
    x = jnp.transpose(x_nchw, (0, 2, 3, 1))
    out = bottleneck_forward_nhwc(x, params, stride, has_projection, compute_dtype)
    return jnp.transpose(out, (0, 3, 1, 2)).astype(jnp.float32)


# --------------------------------------------------------------------------- #
# Pure-JAX reference (mirrors the kernel's rounding / stat points exactly)
# --------------------------------------------------------------------------- #

def bottleneck_reference(x_nchw, params, stride, has_projection,
                         compute_dtype=jnp.bfloat16):
    f32, cdt = jnp.float32, compute_dtype
    x = jnp.transpose(x_nchw, (0, 2, 3, 1)).astype(f32)
    if stride != 1:
        x = x[:, ::stride, ::stride, :]
    N, H, W, _ = x.shape
    C1 = params["w1"].shape[1]
    xb = x.astype(cdt)

    def scale_shift(y, g, b):
        mean = jnp.mean(y, axis=(0, 1, 2))
        var = jnp.maximum(jnp.mean(y * y, axis=(0, 1, 2)) - mean * mean, 0.0)
        sc = g.reshape(-1) * jax.lax.rsqrt(var + BN_EPS)
        return sc, b.reshape(-1) - mean * sc

    def mm(a, wgt):
        return jnp.einsum("nhwc,co->nhwo", a.astype(cdt), wgt.astype(cdt),
                          preferred_element_type=f32)

    y1 = mm(xb, params["w1"])
    sc1, sh1 = scale_shift(y1, params["g1"], params["be1"])
    a1 = jnp.maximum(y1.astype(cdt).astype(f32) * sc1 + sh1, 0.0).astype(cdt)

    ap = jnp.pad(a1, ((0, 0), (1, 1), (1, 1), (0, 0)))
    w2 = params["w2"].reshape(9 * C1, C1)
    y2 = jnp.zeros(y1.shape, f32)
    for dy in range(3):
        cols = jnp.concatenate(
            [ap[:, dy:dy + H, dx:dx + W, :] for dx in range(3)], axis=-1)
        y2 = y2 + mm(cols, w2[dy * 3 * C1:(dy + 1) * 3 * C1])
    sc2, sh2 = scale_shift(y2, params["g2"], params["be2"])
    a2 = jnp.maximum(y2.astype(cdt).astype(f32) * sc2 + sh2, 0.0)

    y3 = mm(a2, params["w3"])
    sc3, sh3 = scale_shift(y3, params["g3"], params["be3"])
    o = y3.astype(cdt).astype(f32) * sc3 + sh3

    if has_projection:
        ysc = mm(xb, params["wsc"])
        scs, shs = scale_shift(ysc, params["gsc"], params["besc"])
        sc = ysc.astype(cdt).astype(f32) * scs + shs
    else:
        sc = xb.astype(f32)
    out = jnp.maximum(o + sc, 0.0).astype(cdt)
    return jnp.transpose(out, (0, 3, 1, 2)).astype(f32)


# --------------------------------------------------------------------------- #
if __name__ == "__main__":
    key = jax.random.PRNGKey(0)
    k_x1, k_p1, k_x2, k_p2, k_x3, k_p3 = jax.random.split(key, 6)
    TOL = dict(rtol=5e-2, atol=5e-2)   # bf16 MXU operands through 3 BN layers

    # Case 1: projection shortcut (in_ch != out_ch*mul), stride 1.
    N, in_ch, H, W = 2, 4, 16, 16
    out_ch, stride = 8, 1
    x1 = jax.random.normal(k_x1, (N, in_ch, H, W), jnp.float32)
    params1, proj1 = init_params(k_p1, in_ch, out_ch, stride)
    assert proj1
    out1 = jax.block_until_ready(bottleneck_forward(x1, params1, stride, proj1))
    ref1 = bottleneck_reference(x1, params1, stride, proj1)
    assert out1.shape == (N, out_ch * MUL, H, W), out1.shape
    assert bool(jnp.all(jnp.isfinite(out1)))
    assert jnp.allclose(out1, ref1, **TOL), float(jnp.max(jnp.abs(out1 - ref1)))

    # Case 2: identity shortcut (in_ch == out_ch*mul, stride 1) — no projection.
    in_ch2, out_ch2 = 32, 8
    x2 = jax.random.normal(k_x2, (N, in_ch2, H, W), jnp.float32)
    params2, proj2 = init_params(k_p2, in_ch2, out_ch2, 1)
    assert not proj2
    out2 = jax.block_until_ready(bottleneck_forward(x2, params2, 1, proj2))
    ref2 = bottleneck_reference(x2, params2, 1, proj2)
    assert bool(jnp.all(jnp.isfinite(out2)))
    assert jnp.allclose(out2, ref2, **TOL), float(jnp.max(jnp.abs(out2 - ref2)))

    # Case 3: projection shortcut with stride 2 (spatial downsampling).
    in_ch3, out_ch3, stride3 = 4, 8, 2
    x3 = jax.random.normal(k_x3, (N, in_ch3, H, W), jnp.float32)
    params3, proj3 = init_params(k_p3, in_ch3, out_ch3, stride3)
    assert proj3
    out3 = jax.block_until_ready(bottleneck_forward(x3, params3, stride3, proj3))
    ref3 = bottleneck_reference(x3, params3, stride3, proj3)
    assert out3.shape == (N, out_ch3 * MUL, H // 2, W // 2), out3.shape
    assert bool(jnp.all(jnp.isfinite(out3)))
    assert jnp.allclose(out3, ref3, **TOL), float(jnp.max(jnp.abs(out3 - ref3)))

    print("KERNEL_OK")
</pallas_src>

<mosaic_0001>
module attributes {stable_mosaic.version = 11 : i64} {
  func.func @_stage1_kernel(%arg0: i32, %arg1: memref<256x4xbf16, #tpu.memory_space<vmem>>, %arg2: memref<4x8xbf16, #tpu.memory_space<vmem>>, %arg3: memref<4x32xbf16, #tpu.memory_space<vmem>>, %arg4: memref<256x8xbf16, #tpu.memory_space<vmem>>, %arg5: memref<256x32xbf16, #tpu.memory_space<vmem>>, %arg6: memref<1x2x8xf32, #tpu.memory_space<vmem>>, %arg7: memref<1x2x32xf32, #tpu.memory_space<vmem>>) attributes {dimension_semantics = [#tpu.dimension_semantics<parallel>], iteration_bounds = array<i64: 2>, scalar_prefetch = 0 : i64, scratch_operands = 0 : i64, tpu.core_type = #tpu.core_type<tc>, window_params = [{transform_indices = @transform_0, window_bounds = array<i64: 256, 4>}, {pipeline_mode = #tpu.pipeline_mode<synchronous>, transform_indices = @transform_1, window_bounds = array<i64: 4, 8>}, {pipeline_mode = #tpu.pipeline_mode<synchronous>, transform_indices = @transform_2, window_bounds = array<i64: 4, 32>}, {transform_indices = @transform_3, window_bounds = array<i64: 256, 8>}, {transform_indices = @transform_4, window_bounds = array<i64: 256, 32>}, {transform_indices = @transform_5, window_bounds = array<i64: 1, 2, 8>}, {transform_indices = @transform_6, window_bounds = array<i64: 1, 2, 32>}]} {
    %c0 = arith.constant 0 : index
    %c0_0 = arith.constant 0 : index
    %0 = vector.load %arg1[%c0, %c0_0] : memref<256x4xbf16, #tpu.memory_space<vmem>>, vector<256x4xbf16>
    %c0_1 = arith.constant 0 : index
    %c0_2 = arith.constant 0 : index
    %1 = vector.load %arg2[%c0_1, %c0_2] : memref<4x8xbf16, #tpu.memory_space<vmem>>, vector<4x8xbf16>
    %cst = arith.constant dense<0.000000e+00> : vector<256x8xf32>
    %2 = tpu.matmul %0, %1, %cst {dimension_numbers = #tpu.dot_dimension_numbers<[1], [0], [0], [1], [0, 0, 1, 1], [], []>} : vector<256x4xbf16>, vector<4x8xbf16>, vector<256x8xf32> -> vector<256x8xf32>
    %3 = arith.truncf %2 : vector<256x8xf32> to vector<256x8xbf16>
    %c0_3 = arith.constant 0 : index
    %c0_4 = arith.constant 0 : index
    %4 = vector.load %arg4[%c0_3, %c0_4] : memref<256x8xbf16, #tpu.memory_space<vmem>>, vector<256x8xbf16>
    tpu.vector_store %arg4[%c0_3, %c0_4], %3 {strides = array<i32>} : memref<256x8xbf16, #tpu.memory_space<vmem>>, vector<256x8xbf16>,
    %cst_5 = arith.constant dense<0.000000e+00> : vector<8xf32>
    %5 = vector.multi_reduction <add>, %2, %cst_5 [0] : vector<256x8xf32> to vector<8xf32>
    %6 = vector.shape_cast %5 : vector<8xf32> to vector<1x8xf32>
    %7 = arith.mulf %2, %2 : vector<256x8xf32>
    %cst_6 = arith.constant dense<0.000000e+00> : vector<8xf32>
    %8 = vector.multi_reduction <add>, %7, %cst_6 [0] : vector<256x8xf32> to vector<8xf32>
    %9 = vector.shape_cast %8 : vector<8xf32> to vector<1x8xf32>
    %10 = tpu.concatenate %6, %9 in 0 : vector<1x8xf32>, vector<1x8xf32> -> vector<2x8xf32>
    %11 = vector.shape_cast %10 : vector<2x8xf32> to vector<1x2x8xf32>
    %c0_7 = arith.constant 0 : index
    %c0_8 = arith.constant 0 : index
    %c0_9 = arith.constant 0 : index
    %12 = vector.load %arg6[%c0_7, %c0_8, %c0_9] : memref<1x2x8xf32, #tpu.memory_space<vmem>>, vector<1x2x8xf32>
    tpu.vector_store %arg6[%c0_7, %c0_8, %c0_9], %11 {strides = array<i32>} : memref<1x2x8xf32, #tpu.memory_space<vmem>>, vector<1x2x8xf32>,
    %c0_10 = arith.constant 0 : index
    %c0_11 = arith.constant 0 : index
    %13 = vector.load %arg3[%c0_10, %c0_11] : memref<4x32xbf16, #tpu.memory_space<vmem>>, vector<4x32xbf16>
    %cst_12 = arith.constant dense<0.000000e+00> : vector<256x32xf32>
    %14 = tpu.matmul %0, %13, %cst_12 {dimension_numbers = #tpu.dot_dimension_numbers<[1], [0], [0], [1], [0, 0, 1, 1], [], []>} : vector<256x4xbf16>, vector<4x32xbf16>, vector<256x32xf32> -> vector<256x32xf32>
    %15 = arith.truncf %14 : vector<256x32xf32> to vector<256x32xbf16>
    %c0_13 = arith.constant 0 : index
    %c0_14 = arith.constant 0 : index
    %16 = vector.load %arg5[%c0_13, %c0_14] : memref<256x32xbf16, #tpu.memory_space<vmem>>, vector<256x32xbf16>
    tpu.vector_store %arg5[%c0_13, %c0_14], %15 {strides = array<i32>} : memref<256x32xbf16, #tpu.memory_space<vmem>>, vector<256x32xbf16>,
    %cst_15 = arith.constant dense<0.000000e+00> : vector<32xf32>
    %17 = vector.multi_reduction <add>, %14, %cst_15 [0] : vector<256x32xf32> to vector<32xf32>
    %18 = vector.shape_cast %17 : vector<32xf32> to vector<1x32xf32>
    %19 = arith.mulf %14, %14 : vector<256x32xf32>
    %cst_16 = arith.constant dense<0.000000e+00> : vector<32xf32>
    %20 = vector.multi_reduction <add>, %19, %cst_16 [0] : vector<256x32xf32> to vector<32xf32>
    %21 = vector.shape_cast %20 : vector<32xf32> to vector<1x32xf32>
    %22 = tpu.concatenate %18, %21 in 0 : vector<1x32xf32>, vector<1x32xf32> -> vector<2x32xf32>
    %23 = vector.shape_cast %22 : vector<2x32xf32> to vector<1x2x32xf32>
    %c0_17 = arith.constant 0 : index
    %c0_18 = arith.constant 0 : index
    %c0_19 = arith.constant 0 : index
    %24 = vector.load %arg7[%c0_17, %c0_18, %c0_19] : memref<1x2x32xf32, #tpu.memory_space<vmem>>, vector<1x2x32xf32>
    tpu.vector_store %arg7[%c0_17, %c0_18, %c0_19], %23 {strides = array<i32>} : memref<1x2x32xf32, #tpu.memory_space<vmem>>, vector<1x2x32xf32>,
    return
  }
  func.func @transform_0(%arg0: i32) -> (i32, i32) {
    %c0_i32 = arith.constant 0 : i32
    %c0_i32_0 = arith.constant 0 : i32
    return %arg0, %c0_i32 : i32, i32
  }
  func.func @transform_1(%arg0: i32) -> (i32, i32) {
    %c0_i32 = arith.constant 0 : i32
    %c0_i32_0 = arith.constant 0 : i32
    %c0_i32_1 = arith.constant 0 : i32
    return %c0_i32, %c0_i32_0 : i32, i32
  }
  func.func @transform_2(%arg0: i32) -> (i32, i32) {
    %c0_i32 = arith.constant 0 : i32
    %c0_i32_0 = arith.constant 0 : i32
    %c0_i32_1 = arith.constant 0 : i32
    return %c0_i32, %c0_i32_0 : i32, i32
  }
  func.func @transform_3(%arg0: i32) -> (i32, i32) {
    %c0_i32 = arith.constant 0 : i32
    %c0_i32_0 = arith.constant 0 : i32
    return %arg0, %c0_i32 : i32, i32
  }
  func.func @transform_4(%arg0: i32) -> (i32, i32) {
    %c0_i32 = arith.constant 0 : i32
    %c0_i32_0 = arith.constant 0 : i32
    return %arg0, %c0_i32 : i32, i32
  }
  func.func @transform_5(%arg0: i32) -> (i32, i32, i32) {
    %c0_i32 = arith.constant 0 : i32
    %c0_i32_0 = arith.constant 0 : i32
    %c0_i32_1 = arith.constant 0 : i32
    return %arg0, %c0_i32, %c0_i32_0 : i32, i32, i32
  }
  func.func @transform_6(%arg0: i32) -> (i32, i32, i32) {
    %c0_i32 = arith.constant 0 : i32
    %c0_i32_0 = arith.constant 0 : i32
    %c0_i32_1 = arith.constant 0 : i32
    return %arg0, %c0_i32, %c0_i32_0 : i32, i32, i32
  }
}

</mosaic_0001>

<llo_original>
// kernel: tpu_custom_call.1
$region0: #{tpu_custom_call.1}
  #allocation0 [shape = 'u32[]', space=smem, size = 0x4, offset = 0x4, fixed_abs, tag = 'smem constant byte address 0x4 - core index']
  #allocation1 [shape = 'u32[72,128]{1,0:T(1,128)}', space=vmem, size = 0x9000, scoped, tag = 'internal scratch']
  %s0 = inlined_call_operand.vmem [shape: bf16[512,4], index: 0, kind: input, shape index: {}]
  %s1 = inlined_call_operand.vmem [shape: bf16[4,8], index: 1, kind: input, shape index: {}]
  %s2 = inlined_call_operand.vmem [shape: bf16[4,32], index: 2, kind: input, shape index: {}]
  %s3 = inlined_call_operand.vmem [shape: bf16[512,8], index: 3, kind: output, shape index: {0}]
  %s4 = inlined_call_operand.vmem [shape: bf16[512,32], index: 4, kind: output, shape index: {1}]
  %s5 = inlined_call_operand.hbm [shape: f32[2,2,8], index: 5, kind: output, shape index: {2}]
  %s6 = inlined_call_operand.hbm [shape: f32[2,2,32], index: 6, kind: output, shape index: {3}]
  %7 = xla_tuple %s3, %s4, %s5, %s6
  %s8 = sld [smem:[#allocation0]]
  $region69: #{tpu_custom_call.1} parent=0
    _
  %s10 = ssub.s32 1, %s8
  %s11 = scalar_select 0, %s10, %s8
  $region1: #{tpu_custom_call.1} parent=0
    #allocation2 [shape = 'u8[2048]{0}', space=vmem, size = 0x800, scoped, tag = 'output window, operand 2']
    #allocation3 [shape = 's32[2]{0}', space=sflag, size = 0x8, scoped, tag = 'scoped memory for tpu_custom_call.1']
    #allocation4 [shape = 'u8[2048]{0}', space=vmem, size = 0x800, scoped, tag = 'output window, operand 3']
    #allocation5 [shape = 's32[2]{0}', space=sflag, size = 0x8, scoped, tag = 'scoped memory for tpu_custom_call.1']
    %12 = vsyncpa [#allocation3], 0
    %s13 = scalar_lea.sflag [#allocation3], 1
    %14 = vsyncpa %s13, 0
    %15 = vsyncpa [#allocation5], 0
    %s16 = scalar_lea.sflag [#allocation5], 1
    %17 = vsyncpa %s16, 0
    loop: start=0, step=1, limit=4
    $region2: #{tpu_custom_call.1} parent=1 // loop_pre_header
      _
    $region3: #{tpu_custom_call.1} parent=1 // loop_header
      %s19 = sphi 0, %s23
      %p20 = scmp.ge.s32.totalorder %s19, 4
      %s29 = sphi 0, %s31
      %s32 = sphi 0, %s29
      %s33 = sphi 0, %s32
      %s49 = sphi 0, %s33
      %s53 = sphi 0, %s53
      %s55 = sphi 0, %s53
      %s56 = sphi 0, %s55
      %s70 = sphi 0, %s56
      %s74 = sphi 0, %s74
      %s76 = sphi 0, %s74
      %s77 = sphi 0, %s76
      %s91 = sphi 0, %s77
      %s97 = sphi 0, %s99
      %s100 = sphi 0, %s97
      %s101 = sphi 0, %s100
      %s117 = sphi 0, %s101
      %s123 = sphi 0, %s125
      %s126 = sphi 0, %s123
      %s127 = sphi 0, %s126
      %s143 = sphi 0, %s127
      %s149 = sphi 0, %s151
      %s152 = sphi 0, %s149
      %s153 = sphi 0, %s152
      %s169 = sphi 0, %s153
      %s175 = sphi 0, %s177
      %s178 = sphi 0, %s175
      %s179 = sphi 0, %s178
      %s195 = sphi 0, %s179
    $region4: #{tpu_custom_call.1} parent=1 // loop_header_branch
      %22 = sbr.rel (%p20) target = $region8
    $region5: #{tpu_custom_call.1} parent=1 // loop_body
      %s24 = ssub.s32 %s19, 1
      %s25 = ssub.s32 %s19, 2
      %s26 = sadd.s32 %s19, 1
      %s27 = ssub.s32 %s19, %s26
      %p28 = scmp.eq.s32.totalorder %s27, 0
      %s30 = sadd.s32 %s29, 1
      %s31 = scalar_select %p28, %s29, %s30
      %p34 = pneg %p28
      %p35 = scmp.eq.s32.totalorder %s19, 1
      %p36 = por %p34, %p35
      %p37 = scmp.ne.s32.totalorder %s29, %s32
      %p38 = scmp.eq.s32.totalorder %s19, 0
      %p39 = por %p37, %p38
      %p40 = scmp.ne.s32.totalorder %s29, %s32
      %p41 = scmp.eq.s32.totalorder %s24, 1
      %p42 = por %p40, %p41
      %p43 = scmp.ne.s32.totalorder %s32, %s33
      %p44 = scmp.eq.s32.totalorder %s24, 0
      %p45 = por %p43, %p44
      %p46 = scmp.ne.s32.totalorder %s32, %s33
      %p47 = scmp.eq.s32.totalorder %s25, 1
      %p48 = por %p46, %p47
      %p50 = scmp.ne.s32.totalorder %s33, %s49
      %p51 = scmp.eq.s32.totalorder %s25, 0
      %p52 = por %p50, %p51
      %s54 = sadd.s32 %s53, 1
      %p57 = scmp.eq.s32.totalorder %s19, 1
      %p58 = scmp.ne.s32.totalorder %s53, %s55
      %p59 = scmp.eq.s32.totalorder %s19, 0
      %p60 = por %p58, %p59
      %p61 = scmp.ne.s32.totalorder %s53, %s55
      %p62 = scmp.eq.s32.totalorder %s24, 1
      %p63 = por %p61, %p62
      %p64 = scmp.ne.s32.totalorder %s55, %s56
      %p65 = scmp.eq.s32.totalorder %s24, 0
      %p66 = por %p64, %p65
      %p67 = scmp.ne.s32.totalorder %s55, %s56
      %p68 = scmp.eq.s32.totalorder %s25, 1
      %p69 = por %p67, %p68
      %p71 = scmp.ne.s32.totalorder %s56, %s70
      %p72 = scmp.eq.s32.totalorder %s25, 0
      %p73 = por %p71, %p72
      %s75 = sadd.s32 %s74, 1
      %p78 = scmp.eq.s32.totalorder %s19, 1
      %p79 = scmp.ne.s32.totalorder %s74, %s76
      %p80 = scmp.eq.s32.totalorder %s19, 0
      %p81 = por %p79, %p80
      %p82 = scmp.ne.s32.totalorder %s74, %s76
      %p83 = scmp.eq.s32.totalorder %s24, 1
      %p84 = por %p82, %p83
      %p85 = scmp.ne.s32.totalorder %s76, %s77
      %p86 = scmp.eq.s32.totalorder %s24, 0
      %p87 = por %p85, %p86
      %p88 = scmp.ne.s32.totalorder %s76, %s77
      %p89 = scmp.eq.s32.totalorder %s25, 1
      %p90 = por %p88, %p89
      %p92 = scmp.ne.s32.totalorder %s77, %s91
      %p93 = scmp.eq.s32.totalorder %s25, 0
      %p94 = por %p92, %p93
      %s95 = ssub.s32 %s19, %s26
      %p96 = scmp.eq.s32.totalorder %s95, 0
      %s98 = sadd.s32 %s97, 1
      %s99 = scalar_select %p96, %s97, %s98
      %p102 = pneg %p96
      %p103 = scmp.eq.s32.totalorder %s19, 1
      %p104 = por %p102, %p103
      %p105 = scmp.ne.s32.totalorder %s97, %s100
      %p106 = scmp.eq.s32.totalorder %s19, 0
      %p107 = por %p105, %p106
      %p108 = scmp.ne.s32.totalorder %s97, %s100
      %p109 = scmp.eq.s32.totalorder %s24, 1
      %p110 = por %p108, %p109
      %p111 = scmp.ne.s32.totalorder %s100, %s101
      %p112 = scmp.eq.s32.totalorder %s24, 0
      %p113 = por %p111, %p112
      %p114 = scmp.ne.s32.totalorder %s100, %s101
      %p115 = scmp.eq.s32.totalorder %s25, 1
      %p116 = por %p114, %p115
      %p118 = scmp.ne.s32.totalorder %s101, %s117
      %p119 = scmp.eq.s32.totalorder %s25, 0
      %p120 = por %p118, %p119
      %s121 = ssub.s32 %s19, %s26
      %p122 = scmp.eq.s32.totalorder %s121, 0
      %s124 = sadd.s32 %s123, 1
      %s125 = scalar_select %p122, %s123, %s124
      %p128 = pneg %p122
      %p129 = scmp.eq.s32.totalorder %s19, 1
      %p130 = por %p128, %p129
      %p131 = scmp.ne.s32.totalorder %s123, %s126
      %p132 = scmp.eq.s32.totalorder %s19, 0
      %p133 = por %p131, %p132
      %p134 = scmp.ne.s32.totalorder %s123, %s126
      %p135 = scmp.eq.s32.totalorder %s24, 1
      %p136 = por %p134, %p135
      %p137 = scmp.ne.s32.totalorder %s126, %s127
      %p138 = scmp.eq.s32.totalorder %s24, 0
      %p139 = por %p137, %p138
      %p140 = scmp.ne.s32.totalorder %s126, %s127
      %p141 = scmp.eq.s32.totalorder %s25, 1
      %p142 = por %p140, %p141
      %p144 = scmp.ne.s32.totalorder %s127, %s143
      %p145 = scmp.eq.s32.totalorder %s25, 0
      %p146 = por %p144, %p145
      %s147 = ssub.s32 %s19, %s26
      %p148 = scmp.eq.s32.totalorder %s147, 0
      %s150 = sadd.s32 %s149, 1
      %s151 = scalar_select %p148, %s149, %s150
      %p154 = pneg %p148
      %p155 = scmp.eq.s32.totalorder %s19, 1
      %p156 = por %p154, %p155
      %p157 = scmp.ne.s32.totalorder %s149, %s152
      %p158 = scmp.eq.s32.totalorder %s19, 0
      %p159 = por %p157, %p158
      %p160 = scmp.ne.s32.totalorder %s149, %s152
      %p161 = scmp.eq.s32.totalorder %s24, 1
      %p162 = por %p160, %p161
      %p163 = scmp.ne.s32.totalorder %s152, %s153
      %p164 = scmp.eq.s32.totalorder %s24, 0
      %p165 = por %p163, %p164
      %p166 = scmp.ne.s32.totalorder %s152, %s153
      %p167 = scmp.eq.s32.totalorder %s25, 1
      %p168 = por %p166, %p167
      %p170 = scmp.ne.s32.totalorder %s153, %s169
      %p171 = scmp.eq.s32.totalorder %s25, 0
      %p172 = por %p170, %p171
      %s173 = ssub.s32 %s19, %s26
      %p174 = scmp.eq.s32.totalorder %s173, 0
      %s176 = sadd.s32 %s175, 1
      %s177 = scalar_select %p174, %s175, %s176
      %p180 = pneg %p174
      %p181 = scmp.eq.s32.totalorder %s19, 1
      %p182 = por %p180, %p181
      %p183 = scmp.ne.s32.totalorder %s175, %s178
      %p184 = scmp.eq.s32.totalorder %s19, 0
      %p185 = por %p183, %p184
      %p186 = scmp.ne.s32.totalorder %s175, %s178
      %p187 = scmp.eq.s32.totalorder %s24, 1
      %p188 = por %p186, %p187
      %p189 = scmp.ne.s32.totalorder %s178, %s179
      %p190 = scmp.eq.s32.totalorder %s24, 0
      %p191 = por %p189, %p190
      %p192 = scmp.ne.s32.totalorder %s178, %s179
      %p193 = scmp.eq.s32.totalorder %s25, 1
      %p194 = por %p192, %p193
      %p196 = scmp.ne.s32.totalorder %s179, %s195
      %p197 = scmp.eq.s32.totalorder %s25, 0
      %p198 = por %p196, %p197
      %p199 = scmp.le.s32.totalorder 1, %s19
      %p200 = scmp.lt.s32.totalorder %s19, 3
      %p201 = pnand %p199, %p200
      %p202 = pneg %p201
      // Predicated region
      $region9: #{tpu_custom_call.1} parent=5 // pred_check
        _
      $region10: #{tpu_custom_call.1} parent=5 // pred_check_branch
        %204 = sbr.rel (%p201) target = $region12
      $region11: #{tpu_custom_call.1} parent=5 // pred_region
        %s205 = ssub.s32 %s19, 1
        // Predicated region
        $region13: #{tpu_custom_call.1} parent=11 // pred_check
          %p206 = pneg %p66
        $region14: #{tpu_custom_call.1} parent=11 // pred_check_branch
          %208 = sbr.rel (%p206) target = $region16
        $region15: #{tpu_custom_call.1} parent=11 // pred_region
          _
        $region16: #{tpu_custom_call.1} parent=11 // pred_fallthru
          _
        // Predicated region
        $region17: #{tpu_custom_call.1} parent=11 // pred_check
          %p209 = pneg %p87
        $region18: #{tpu_custom_call.1} parent=11 // pred_check_branch
          %211 = sbr.rel (%p209) target = $region20
        $region19: #{tpu_custom_call.1} parent=11 // pred_region
          _
        $region20: #{tpu_custom_call.1} parent=11 // pred_fallthru
          _
      $region12: #{tpu_custom_call.1} parent=5 // pred_fallthru
        _
      %p212 = scmp.lt.s32.totalorder %s19, 2
      // Predicated region
      $region21: #{tpu_custom_call.1} parent=5 // pred_check
        %p213 = pneg %p212
      $region22: #{tpu_custom_call.1} parent=5 // pred_check_branch
        %215 = sbr.rel (%p213) target = $region24
      $region23: #{tpu_custom_call.1} parent=5 // pred_region
        // Predicated region
        $region25: #{tpu_custom_call.1} parent=23 // pred_check
          %p216 = pneg %p39
        $region26: #{tpu_custom_call.1} parent=23 // pred_check_branch
          %218 = sbr.rel (%p216) target = $region28
        $region27: #{tpu_custom_call.1} parent=23 // pred_region
          %s219 = smul.u32 32, %s19
          %p220 = scmp.lt.s32.totalorder %s219, 63
          %s221 = scalar_select %p220, %s219, 63
          %s222 = smul.addr %s221, 4
          %s223 = scalar_lea.vmem %s0, %s222
          %s224 = smul.u32 32, %s19
        $region28: #{tpu_custom_call.1} parent=23 // pred_fallthru
          _
      $region24: #{tpu_custom_call.1} parent=5 // pred_fallthru
        _
      %p225 = scmp.le.s32.totalorder 1, %s19
      %p226 = scmp.lt.s32.totalorder %s19, 3
      %p227 = pnand %p225, %p226
      %p228 = pneg %p227
      // Predicated region
      $region29: #{tpu_custom_call.1} parent=5 // pred_check
        _
      $region30: #{tpu_custom_call.1} parent=5 // pred_check_branch
        %230 = sbr.rel (%p227) target = $region32
      $region31: #{tpu_custom_call.1} parent=5 // pred_region
        %s231 = ssub.s32 %s19, 1
        %s232 = smul.u32 32, %s24
        %p233 = scmp.lt.s32.totalorder %s232, 63
        %s234 = scalar_select %p233, %s232, 63
        %s235 = smul.addr %s234, 4
        %s236 = scalar_lea.vmem %s0, %s235
        %p237 = pneg %p45
        %p238 = pneg %p42
        %p239 = pneg %p66
        %p240 = pneg %p63
        %p241 = pneg %p87
        %p242 = pneg %p84
        %p243 = pneg %p113
        %p244 = pneg %p110
        %s245 = smul.u32 32, %s24
        %p246 = scmp.lt.s32.totalorder %s245, 63
        %s247 = scalar_select %p246, %s245, 63
        %s248 = smul.addr %s247, 4
        %s249 = scalar_lea.vmem %s3, %s248
        %p250 = pneg %p139
        %p251 = pneg %p136
        %s252 = smul.u32 32, %s24
        %p253 = scmp.lt.s32.totalorder %s252, 63
        %s254 = scalar_select %p253, %s252, 63
        %s255 = smul.addr %s254, 4
        %s256 = scalar_lea.vmem %s4, %s255
        %p257 = pneg %p165
        %p258 = pneg %p162
        %s259 = sand.u32 %s152, 1
        %s260 = scalar_lea.sflag [#allocation3], %s259
        %s261 = sand.u32 %s152, 1
        %s262 = smul.addr %s261, 2
        %s263 = scalar_lea.vmem [#allocation2], %s262
        %p264 = pneg %p191
        %p265 = pneg %p188
        %s266 = sand.u32 %s178, 1
        %s267 = scalar_lea.sflag [#allocation5], %s266
        %s268 = sand.u32 %s178, 1
        %s269 = smul.addr %s268, 2
        %s270 = scalar_lea.vmem [#allocation4], %s269
        %s271 = smul.u32 32, %s24
        %p272 = scmp.lt.s32.totalorder %s271, 63
        %s273 = scalar_select %p272, %s271, 63
        %s274 = smul.addr %s273, 4
        %s275 = scalar_lea.vmem %s0, %s274
        %s276 = smul.u32 32, %s24
        %s277 = smul.u32 32, %s24
        %p278 = scmp.lt.s32.totalorder %s277, 63
        %s279 = scalar_select %p278, %s277, 63
        %s280 = smul.addr %s279, 4
        %s281 = scalar_lea.vmem %s3, %s280
        %s282 = smul.u32 32, %s24
        %s283 = smul.u32 32, %s24
        %p284 = scmp.lt.s32.totalorder %s283, 63
        %s285 = scalar_select %p284, %s283, 63
        %s286 = smul.addr %s285, 4
        %s287 = scalar_lea.vmem %s4, %s286
        %s288 = smul.u32 32, %s24
        %v290 = vld [vmem:[%s275] sm:$0xf]
        %v291 = vld [vmem:[%s275 + $0x4] sm:$0xf]
        %v292 = vld [vmem:[%s275 + $0x8] sm:$0xf]
        %v293 = vld [vmem:[%s275 + $0xc] sm:$0xf]
        %v294 = vld [vmem:[%s275 + $0x10] sm:$0xf]
        %v295 = vld [vmem:[%s275 + $0x14] sm:$0xf]
        %v296 = vld [vmem:[%s275 + $0x18] sm:$0xf]
        %v297 = vld [vmem:[%s275 + $0x1c] sm:$0xf]
        %v298 = vld [vmem:[%s275 + $0x20] sm:$0xf]
        %v299 = vld [vmem:[%s275 + $0x24] sm:$0xf]
        %v300 = vld [vmem:[%s275 + $0x28] sm:$0xf]
        %v301 = vld [vmem:[%s275 + $0x2c] sm:$0xf]
        %v302 = vld [vmem:[%s275 + $0x30] sm:$0xf]
        %v303 = vld [vmem:[%s275 + $0x34] sm:$0xf]
        %v304 = vld [vmem:[%s275 + $0x38] sm:$0xf]
        %v305 = vld [vmem:[%s275 + $0x3c] sm:$0xf]
        %v306 = vld [vmem:[%s275 + $0x40] sm:$0xf]
        %v307 = vld [vmem:[%s275 + $0x44] sm:$0xf]
        %v308 = vld [vmem:[%s275 + $0x48] sm:$0xf]
        %v309 = vld [vmem:[%s275 + $0x4c] sm:$0xf]
        %v310 = vld [vmem:[%s275 + $0x50] sm:$0xf]
        %v311 = vld [vmem:[%s275 + $0x54] sm:$0xf]
        %v312 = vld [vmem:[%s275 + $0x58] sm:$0xf]
        %v313 = vld [vmem:[%s275 + $0x5c] sm:$0xf]
        %v314 = vld [vmem:[%s275 + $0x60] sm:$0xf]
        %v315 = vld [vmem:[%s275 + $0x64] sm:$0xf]
        %v316 = vld [vmem:[%s275 + $0x68] sm:$0xf]
        %v317 = vld [vmem:[%s275 + $0x6c] sm:$0xf]
        %v318 = vld [vmem:[%s275 + $0x70] sm:$0xf]
        %v319 = vld [vmem:[%s275 + $0x74] sm:$0xf]
        %v320 = vld [vmem:[%s275 + $0x78] sm:$0xf]
        %v321 = vld [vmem:[%s275 + $0x7c] sm:$0xf]
        %v322 = vld [vmem:[%s1] sm:$0x3]
        %v355 = vunpack.c.l.b16 %v290
        %v356 = vunpack.c.l.b16 %v291
        %v357 = vunpack.c.l.b16 %v292
        %v358 = vunpack.c.l.b16 %v293
        %v359 = vunpack.c.l.b16 %v294
        %v360 = vunpack.c.l.b16 %v295
        %v361 = vunpack.c.l.b16 %v296
        %v362 = vunpack.c.l.b16 %v297
        %v363 = vunpack.c.l.b16 %v298
        %v364 = vunpack.c.l.b16 %v299
        %v365 = vunpack.c.l.b16 %v300
        %v366 = vunpack.c.l.b16 %v301
        %v367 = vunpack.c.l.b16 %v302
        %v368 = vunpack.c.l.b16 %v303
        %v369 = vunpack.c.l.b16 %v304
        %v370 = vunpack.c.l.b16 %v305
        %v371 = vunpack.c.l.b16 %v306
        %v372 = vunpack.c.l.b16 %v307
        %v373 = vunpack.c.l.b16 %v308
        %v374 = vunpack.c.l.b16 %v309
        %v375 = vunpack.c.l.b16 %v310
        %v376 = vunpack.c.l.b16 %v311
        %v377 = vunpack.c.l.b16 %v312
        %v378 = vunpack.c.l.b16 %v313
        %v379 = vunpack.c.l.b16 %v314
        %v380 = vunpack.c.l.b16 %v315
        %v381 = vunpack.c.l.b16 %v316
        %v382 = vunpack.c.l.b16 %v317
        %v383 = vunpack.c.l.b16 %v318
        %v384 = vunpack.c.l.b16 %v319
        %v385 = vunpack.c.l.b16 %v320
        %v386 = vunpack.c.l.b16 %v321
        %v387 = vpack.c.b16 %v356, %v355
        %v388 = vpack.c.b16 %v358, %v357
        %v389 = vpack.c.b16 %v360, %v359
        %v390 = vpack.c.b16 %v362, %v361
        %v391 = vpack.c.b16 %v364, %v363
        %v392 = vpack.c.b16 %v366, %v365
        %v393 = vpack.c.b16 %v368, %v367
        %v394 = vpack.c.b16 %v370, %v369
        %v395 = vpack.c.b16 %v372, %v371
        %v396 = vpack.c.b16 %v374, %v373
        %v397 = vpack.c.b16 %v376, %v375
        %v398 = vpack.c.b16 %v378, %v377
        %v399 = vpack.c.b16 %v380, %v379
        %v400 = vpack.c.b16 %v382, %v381
        %v401 = vpack.c.b16 %v384, %v383
        %v402 = vpack.c.b16 %v386, %v385
        %vm403 = vcmask 31744
        %v405 = vsel %vm403, %v387, 0
        %v408 = vsel %vm403, %v388, 0
        %v411 = vsel %vm403, %v389, 0
        %v414 = vsel %vm403, %v390, 0
        %v417 = vsel %vm403, %v391, 0
        %v420 = vsel %vm403, %v392, 0
        %v423 = vsel %vm403, %v393, 0
        %v426 = vsel %vm403, %v394, 0
        %v429 = vsel %vm403, %v395, 0
        %v432 = vsel %vm403, %v396, 0
        %v435 = vsel %vm403, %v397, 0
        %v438 = vsel %vm403, %v398, 0
        %v441 = vsel %vm403, %v399, 0
        %v444 = vsel %vm403, %v400, 0
        %v447 = vsel %vm403, %v401, 0
        %v450 = vsel %vm403, %v402, 0
        %vm452 = vcmask 1041408
        %v454 = vsel %vm452, %v322, 0
        %456 = vmatpush.bf16.msra.mxu0 0
        %457 = vmatpush.bf16.msra.mxu0 0
        %458 = vmatpush.bf16.msra.mxu0 0
        %459 = vmatpush.bf16.msra.mxu0 0
        %460 = vmatpush.bf16.msra.mxu0 0
        %461 = vmatpush.bf16.msra.mxu0 0
        %462 = vmatpush.bf16.msra.mxu0 0
        %463 = vmatpush.bf16.msra.mxu0 %v454
        %464 = vmatmul.bf16.gmra.mxu0 %v405
        %v465 = vpop.f32.mrf.mxu0
        %v466 = vadd.f32 0.0, %v465
        %v467 = vpop.f32.mrf.mxu0
        %v468 = vadd.f32 0.0, %v467
        %469 = vmatmul.bf16.gmra.mxu0 %v408
        %v470 = vpop.f32.mrf.mxu0
        %v471 = vadd.f32 0.0, %v470
        %v472 = vpop.f32.mrf.mxu0
        %v473 = vadd.f32 0.0, %v472
        %474 = vmatmul.bf16.gmra.mxu0 %v411
        %v475 = vpop.f32.mrf.mxu0
        %v476 = vadd.f32 0.0, %v475
        %v477 = vpop.f32.mrf.mxu0
        %v478 = vadd.f32 0.0, %v477
        %479 = vmatmul.bf16.gmra.mxu0 %v414
        %v480 = vpop.f32.mrf.mxu0
        %v481 = vadd.f32 0.0, %v480
        %v482 = vpop.f32.mrf.mxu0
        %v483 = vadd.f32 0.0, %v482
        %484 = vmatmul.bf16.gmra.mxu0 %v417
        %v485 = vpop.f32.mrf.mxu0
        %v486 = vadd.f32 0.0, %v485
        %v487 = vpop.f32.mrf.mxu0
        %v488 = vadd.f32 0.0, %v487
        %489 = vmatmul.bf16.gmra.mxu0 %v420
        %v490 = vpop.f32.mrf.mxu0
        %v491 = vadd.f32 0.0, %v490
        %v492 = vpop.f32.mrf.mxu0
        %v493 = vadd.f32 0.0, %v492
        %494 = vmatmul.bf16.gmra.mxu0 %v423
        %v495 = vpop.f32.mrf.mxu0
        %v496 = vadd.f32 0.0, %v495
        %v497 = vpop.f32.mrf.mxu0
        %v498 = vadd.f32 0.0, %v497
        %499 = vmatmul.bf16.gmra.mxu0 %v426
        %v500 = vpop.f32.mrf.mxu0
        %v501 = vadd.f32 0.0, %v500
        %v502 = vpop.f32.mrf.mxu0
        %v503 = vadd.f32 0.0, %v502
        %504 = vmatmul.bf16.gmra.mxu0 %v429
        %v505 = vpop.f32.mrf.mxu0
        %v506 = vadd.f32 0.0, %v505
        %v507 = vpop.f32.mrf.mxu0
        %v508 = vadd.f32 0.0, %v507
        %509 = vmatmul.bf16.gmra.mxu0 %v432
        %v510 = vpop.f32.mrf.mxu0
        %v511 = vadd.f32 0.0, %v510
        %v512 = vpop.f32.mrf.mxu0
        %v513 = vadd.f32 0.0, %v512
        %514 = vmatmul.bf16.gmra.mxu0 %v435
        %v515 = vpop.f32.mrf.mxu0
        %v516 = vadd.f32 0.0, %v515
        %v517 = vpop.f32.mrf.mxu0
        %v518 = vadd.f32 0.0, %v517
        %519 = vmatmul.bf16.gmra.mxu0 %v438
        %v520 = vpop.f32.mrf.mxu0
        %v521 = vadd.f32 0.0, %v520
        %v522 = vpop.f32.mrf.mxu0
        %v523 = vadd.f32 0.0, %v522
        %524 = vmatmul.bf16.gmra.mxu0 %v441
        %v525 = vpop.f32.mrf.mxu0
        %v526 = vadd.f32 0.0, %v525
        %v527 = vpop.f32.mrf.mxu0
        %v528 = vadd.f32 0.0, %v527
        %529 = vmatmul.bf16.gmra.mxu0 %v444
        %v530 = vpop.f32.mrf.mxu0
        %v531 = vadd.f32 0.0, %v530
        %v532 = vpop.f32.mrf.mxu0
        %v533 = vadd.f32 0.0, %v532
        %534 = vmatmul.bf16.gmra.mxu0 %v447
        %v535 = vpop.f32.mrf.mxu0
        %v536 = vadd.f32 0.0, %v535
        %v537 = vpop.f32.mrf.mxu0
        %v538 = vadd.f32 0.0, %v537
        %539 = vmatmul.bf16.gmra.mxu0 %v450
        %v540 = vpop.f32.mrf.mxu0
        %v541 = vadd.f32 0.0, %v540
        %v542 = vpop.f32.mrf.mxu0
        %v543 = vadd.f32 0.0, %v542
        %544 = vdwg.mxu0
        %v545 = vpack.c.bf16 %v466, %v466
        %v546 = vpack.c.bf16 %v468, %v468
        %v547 = vpack.c.bf16 %v471, %v471
        %v548 = vpack.c.bf16 %v473, %v473
        %v549 = vpack.c.bf16 %v476, %v476
        %v550 = vpack.c.bf16 %v478, %v478
        %v551 = vpack.c.bf16 %v481, %v481
        %v552 = vpack.c.bf16 %v483, %v483
        %v553 = vpack.c.bf16 %v486, %v486
        %v554 = vpack.c.bf16 %v488, %v488
        %v555 = vpack.c.bf16 %v491, %v491
        %v556 = vpack.c.bf16 %v493, %v493
        %v557 = vpack.c.bf16 %v496, %v496
        %v558 = vpack.c.bf16 %v498, %v498
        %v559 = vpack.c.bf16 %v501, %v501
        %v560 = vpack.c.bf16 %v503, %v503
        %v561 = vpack.c.bf16 %v506, %v506
        %v562 = vpack.c.bf16 %v508, %v508
        %v563 = vpack.c.bf16 %v511, %v511
        %v564 = vpack.c.bf16 %v513, %v513
        %v565 = vpack.c.bf16 %v516, %v516
        %v566 = vpack.c.bf16 %v518, %v518
        %v567 = vpack.c.bf16 %v521, %v521
        %v568 = vpack.c.bf16 %v523, %v523
        %v569 = vpack.c.bf16 %v526, %v526
        %v570 = vpack.c.bf16 %v528, %v528
        %v571 = vpack.c.bf16 %v531, %v531
        %v572 = vpack.c.bf16 %v533, %v533
        %v573 = vpack.c.bf16 %v536, %v536
        %v574 = vpack.c.bf16 %v538, %v538
        %v575 = vpack.c.bf16 %v541, %v541
        %v576 = vpack.c.bf16 %v543, %v543
        %vm577 = vcmask 60416
        %578 = vst.msk [vmem:[%s281] sm:$0xf] %vm577, %v545
        %579 = vst.msk [vmem:[%s281 + $0x4] sm:$0xf] %vm577, %v546
        %580 = vst.msk [vmem:[%s281 + $0x8] sm:$0xf] %vm577, %v547
        %581 = vst.msk [vmem:[%s281 + $0xc] sm:$0xf] %vm577, %v548
        %582 = vst.msk [vmem:[%s281 + $0x10] sm:$0xf] %vm577, %v549
        %583 = vst.msk [vmem:[%s281 + $0x14] sm:$0xf] %vm577, %v550
        %584 = vst.msk [vmem:[%s281 + $0x18] sm:$0xf] %vm577, %v551
        %585 = vst.msk [vmem:[%s281 + $0x1c] sm:$0xf] %vm577, %v552
        %586 = vst.msk [vmem:[%s281 + $0x20] sm:$0xf] %vm577, %v553
        %587 = vst.msk [vmem:[%s281 + $0x24] sm:$0xf] %vm577, %v554
        %588 = vst.msk [vmem:[%s281 + $0x28] sm:$0xf] %vm577, %v555
        %589 = vst.msk [vmem:[%s281 + $0x2c] sm:$0xf] %vm577, %v556
        %590 = vst.msk [vmem:[%s281 + $0x30] sm:$0xf] %vm577, %v557
        %591 = vst.msk [vmem:[%s281 + $0x34] sm:$0xf] %vm577, %v558
        %592 = vst.msk [vmem:[%s281 + $0x38] sm:$0xf] %vm577, %v559
        %593 = vst.msk [vmem:[%s281 + $0x3c] sm:$0xf] %vm577, %v560
        %594 = vst.msk [vmem:[%s281 + $0x40] sm:$0xf] %vm577, %v561
        %595 = vst.msk [vmem:[%s281 + $0x44] sm:$0xf] %vm577, %v562
        %596 = vst.msk [vmem:[%s281 + $0x48] sm:$0xf] %vm577, %v563
        %597 = vst.msk [vmem:[%s281 + $0x4c] sm:$0xf] %vm577, %v564
        %598 = vst.msk [vmem:[%s281 + $0x50] sm:$0xf] %vm577, %v565
        %599 = vst.msk [vmem:[%s281 + $0x54] sm:$0xf] %vm577, %v566
        %600 = vst.msk [vmem:[%s281 + $0x58] sm:$0xf] %vm577, %v567
        %601 = vst.msk [vmem:[%s281 + $0x5c] sm:$0xf] %vm577, %v568
        %602 = vst.msk [vmem:[%s281 + $0x60] sm:$0xf] %vm577, %v569
        %603 = vst.msk [vmem:[%s281 + $0x64] sm:$0xf] %vm577, %v570
        %604 = vst.msk [vmem:[%s281 + $0x68] sm:$0xf] %vm577, %v571
        %605 = vst.msk [vmem:[%s281 + $0x6c] sm:$0xf] %vm577, %v572
        %606 = vst.msk [vmem:[%s281 + $0x70] sm:$0xf] %vm577, %v573
        %607 = vst.msk [vmem:[%s281 + $0x74] sm:$0xf] %vm577, %v574
        %608 = vst.msk [vmem:[%s281 + $0x78] sm:$0xf] %vm577, %v575
        %609 = vst.msk [vmem:[%s281 + $0x7c] sm:$0xf] %vm577, %v576
        %vm610 = vcmask 64512
        %v611 = vsel %vm610, %v466, 0.0
        %v612 = vsel %vm610, %v468, 0.0
        %v613 = vadd.f32 %v611, %v612
        %v614 = vsel %vm610, %v471, 0.0
        %v615 = vadd.f32 %v613, %v614
        %v616 = vsel %vm610, %v473, 0.0
        %v617 = vadd.f32 %v615, %v616
        %v618 = vsel %vm610, %v476, 0.0
        %v619 = vadd.f32 %v617, %v618
        %v620 = vsel %vm610, %v478, 0.0
        %v621 = vadd.f32 %v619, %v620
        %v622 = vsel %vm610, %v481, 0.0
        %v623 = vadd.f32 %v621, %v622
        %v624 = vsel %vm610, %v483, 0.0
        %v625 = vadd.f32 %v623, %v624
        %v626 = vsel %vm610, %v486, 0.0
        %v627 = vadd.f32 %v625, %v626
        %v628 = vsel %vm610, %v488, 0.0
        %v629 = vadd.f32 %v627, %v628
        %v630 = vsel %vm610, %v491, 0.0
        %v631 = vadd.f32 %v629, %v630
        %v632 = vsel %vm610, %v493, 0.0
        %v633 = vadd.f32 %v631, %v632
        %v634 = vsel %vm610, %v496, 0.0
        %v635 = vadd.f32 %v633, %v634
        %v636 = vsel %vm610, %v498, 0.0
        %v637 = vadd.f32 %v635, %v636
        %v638 = vsel %vm610, %v501, 0.0
        %v639 = vadd.f32 %v637, %v638
        %v640 = vsel %vm610, %v503, 0.0
        %v641 = vadd.f32 %v639, %v640
        %v642 = vsel %vm610, %v506, 0.0
        %v643 = vadd.f32 %v641, %v642
        %v644 = vsel %vm610, %v508, 0.0
        %v645 = vadd.f32 %v643, %v644
        %v646 = vsel %vm610, %v511, 0.0
        %v647 = vadd.f32 %v645, %v646
        %v648 = vsel %vm610, %v513, 0.0
        %v649 = vadd.f32 %v647, %v648
        %v650 = vsel %vm610, %v516, 0.0
        %v651 = vadd.f32 %v649, %v650
        %v652 = vsel %vm610, %v518, 0.0
        %v653 = vadd.f32 %v651, %v652
        %v654 = vsel %vm610, %v521, 0.0
        %v655 = vadd.f32 %v653, %v654
        %v656 = vsel %vm610, %v523, 0.0
        %v657 = vadd.f32 %v655, %v656
        %v658 = vsel %vm610, %v526, 0.0
        %v659 = vadd.f32 %v657, %v658
        %v660 = vsel %vm610, %v528, 0.0
        %v661 = vadd.f32 %v659, %v660
        %v662 = vsel %vm610, %v531, 0.0
        %v663 = vadd.f32 %v661, %v662
        %v664 = vsel %vm610, %v533, 0.0
        %v665 = vadd.f32 %v663, %v664
        %v666 = vsel %vm610, %v536, 0.0
        %v667 = vadd.f32 %v665, %v666
        %v668 = vsel %vm610, %v538, 0.0
        %v669 = vadd.f32 %v667, %v668
        %v670 = vsel %vm610, %v541, 0.0
        %v671 = vadd.f32 %v669, %v670
        %v672 = vsel %vm610, %v543, 0.0
        %v673 = vadd.f32 %v671, %v672
        %v674 = vrot.slane %v673, 4
        %v675 = vadd.f32 %v673, %v674
        %v676 = vrot.slane %v675, 2
        %v677 = vadd.f32 %v675, %v676
        %v678 = vrot.slane %v677, 1
        %v679 = vadd.f32 %v677, %v678
        %v680 = vmul.f32 %v466, %v466
        %v681 = vmul.f32 %v468, %v468
        %v682 = vmul.f32 %v471, %v471
        %v683 = vmul.f32 %v473, %v473
        %v684 = vmul.f32 %v476, %v476
        %v685 = vmul.f32 %v478, %v478
        %v686 = vmul.f32 %v481, %v481
        %v687 = vmul.f32 %v483, %v483
        %v688 = vmul.f32 %v486, %v486
        %v689 = vmul.f32 %v488, %v488
        %v690 = vmul.f32 %v491, %v491
        %v691 = vmul.f32 %v493, %v493
        %v692 = vmul.f32 %v496, %v496
        %v693 = vmul.f32 %v498, %v498
        %v694 = vmul.f32 %v501, %v501
        %v695 = vmul.f32 %v503, %v503
        %v696 = vmul.f32 %v506, %v506
        %v697 = vmul.f32 %v508, %v508
        %v698 = vmul.f32 %v511, %v511
        %v699 = vmul.f32 %v513, %v513
        %v700 = vmul.f32 %v516, %v516
        %v701 = vmul.f32 %v518, %v518
        %v702 = vmul.f32 %v521, %v521
        %v703 = vmul.f32 %v523, %v523
        %v704 = vmul.f32 %v526, %v526
        %v705 = vmul.f32 %v528, %v528
        %v706 = vmul.f32 %v531, %v531
        %v707 = vmul.f32 %v533, %v533
        %v708 = vmul.f32 %v536, %v536
        %v709 = vmul.f32 %v538, %v538
        %v710 = vmul.f32 %v541, %v541
        %v711 = vmul.f32 %v543, %v543
        %v712 = vsel %vm610, %v680, 0.0
        %v713 = vsel %vm610, %v681, 0.0
        %v714 = vadd.f32 %v712, %v713
        %v715 = vsel %vm610, %v682, 0.0
        %v716 = vadd.f32 %v714, %v715
        %v717 = vsel %vm610, %v683, 0.0
        %v718 = vadd.f32 %v716, %v717
        %v719 = vsel %vm610, %v684, 0.0
        %v720 = vadd.f32 %v718, %v719
        %v721 = vsel %vm610, %v685, 0.0
        %v722 = vadd.f32 %v720, %v721
        %v723 = vsel %vm610, %v686, 0.0
        %v724 = vadd.f32 %v722, %v723
        %v725 = vsel %vm610, %v687, 0.0
        %v726 = vadd.f32 %v724, %v725
        %v727 = vsel %vm610, %v688, 0.0
        %v728 = vadd.f32 %v726, %v727
        %v729 = vsel %vm610, %v689, 0.0
        %v730 = vadd.f32 %v728, %v729
        %v731 = vsel %vm610, %v690, 0.0
        %v732 = vadd.f32 %v730, %v731
        %v733 = vsel %vm610, %v691, 0.0
        %v734 = vadd.f32 %v732, %v733
        %v735 = vsel %vm610, %v692, 0.0
        %v736 = vadd.f32 %v734, %v735
        %v737 = vsel %vm610, %v693, 0.0
        %v738 = vadd.f32 %v736, %v737
        %v739 = vsel %vm610, %v694, 0.0
        %v740 = vadd.f32 %v738, %v739
        %v741 = vsel %vm610, %v695, 0.0
        %v742 = vadd.f32 %v740, %v741
        %v743 = vsel %vm610, %v696, 0.0
        %v744 = vadd.f32 %v742, %v743
        %v745 = vsel %vm610, %v697, 0.0
        %v746 = vadd.f32 %v744, %v745
        %v747 = vsel %vm610, %v698, 0.0
        %v748 = vadd.f32 %v746, %v747
        %v749 = vsel %vm610, %v699, 0.0
        %v750 = vadd.f32 %v748, %v749
        %v751 = vsel %vm610, %v700, 0.0
        %v752 = vadd.f32 %v750, %v751
        %v753 = vsel %vm610, %v701, 0.0
        %v754 = vadd.f32 %v752, %v753
        %v755 = vsel %vm610, %v702, 0.0
        %v756 = vadd.f32 %v754, %v755
        %v757 = vsel %vm610, %v703, 0.0
        %v758 = vadd.f32 %v756, %v757
        %v759 = vsel %vm610, %v704, 0.0
        %v760 = vadd.f32 %v758, %v759
        %v761 = vsel %vm610, %v705, 0.0
        %v762 = vadd.f32 %v760, %v761
        %v763 = vsel %vm610, %v706, 0.0
        %v764 = vadd.f32 %v762, %v763
        %v765 = vsel %vm610, %v707, 0.0
        %v766 = vadd.f32 %v764, %v765
        %v767 = vsel %vm610, %v708, 0.0
        %v768 = vadd.f32 %v766, %v767
        %v769 = vsel %vm610, %v709, 0.0
        %v770 = vadd.f32 %v768, %v769
        %v771 = vsel %vm610, %v710, 0.0
        %v772 = vadd.f32 %v770, %v771
        %v773 = vsel %vm610, %v711, 0.0
        %v774 = vadd.f32 %v772, %v773
        %v775 = vrot.slane %v774, 4
        %v776 = vadd.f32 %v774, %v775
        %v777 = vrot.slane %v776, 2
        %v778 = vadd.f32 %v776, %v777
        %v779 = vrot.slane %v778, 1
        %v780 = vadd.f32 %v778, %v779
        %vm781 = vcmask 1040384
        %v782 = vsel %vm781, %v679, %v780
        %vm783 = vcmask 58368
        %784 = vst.msk [vmem:[%s263] sm:$0x3] %vm783, %v782
        %v785 = vld [vmem:[%s2] sm:$0x3]
        %v787 = vsel %vm452, %v785, 0
        %789 = vmatpush.bf16.msra.mxu0 0
        %790 = vmatpush.bf16.msra.mxu0 0
        %791 = vmatpush.bf16.msra.mxu0 0
        %792 = vmatpush.bf16.msra.mxu0 0
        %793 = vmatpush.bf16.msra.mxu0 0
        %794 = vmatpush.bf16.msra.mxu0 0
        %795 = vmatpush.bf16.msra.mxu0 0
        %796 = vmatpush.bf16.msra.mxu0 %v787
        %797 = vmatmul.bf16.gmra.mxu0 %v405
        %v798 = vpop.f32.mrf.mxu0
        %v799 = vadd.f32 0.0, %v798
        %v800 = vpop.f32.mrf.mxu0
        %v801 = vadd.f32 0.0, %v800
        %802 = vmatmul.bf16.gmra.mxu0 %v408
        %v803 = vpop.f32.mrf.mxu0
        %v804 = vadd.f32 0.0, %v803
        %v805 = vpop.f32.mrf.mxu0
        %v806 = vadd.f32 0.0, %v805
        %807 = vmatmul.bf16.gmra.mxu0 %v411
        %v808 = vpop.f32.mrf.mxu0
        %v809 = vadd.f32 0.0, %v808
        %v810 = vpop.f32.mrf.mxu0
        %v811 = vadd.f32 0.0, %v810
        %812 = vmatmul.bf16.gmra.mxu0 %v414
        %v813 = vpop.f32.mrf.mxu0
        %v814 = vadd.f32 0.0, %v813
        %v815 = vpop.f32.mrf.mxu0
        %v816 = vadd.f32 0.0, %v815
        %817 = vmatmul.bf16.gmra.mxu0 %v417
        %v818 = vpop.f32.mrf.mxu0
        %v819 = vadd.f32 0.0, %v818
        %v820 = vpop.f32.mrf.mxu0
        %v821 = vadd.f32 0.0, %v820
        %822 = vmatmul.bf16.gmra.mxu0 %v420
        %v823 = vpop.f32.mrf.mxu0
        %v824 = vadd.f32 0.0, %v823
        %v825 = vpop.f32.mrf.mxu0
        %v826 = vadd.f32 0.0, %v825
        %827 = vmatmul.bf16.gmra.mxu0 %v423
        %v828 = vpop.f32.mrf.mxu0
        %v829 = vadd.f32 0.0, %v828
        %v830 = vpop.f32.mrf.mxu0
        %v831 = vadd.f32 0.0, %v830
        %832 = vmatmul.bf16.gmra.mxu0 %v426
        %v833 = vpop.f32.mrf.mxu0
        %v834 = vadd.f32 0.0, %v833
        %v835 = vpop.f32.mrf.mxu0
        %v836 = vadd.f32 0.0, %v835
        %837 = vmatmul.bf16.gmra.mxu0 %v429
        %v838 = vpop.f32.mrf.mxu0
        %v839 = vadd.f32 0.0, %v838
        %v840 = vpop.f32.mrf.mxu0
        %v841 = vadd.f32 0.0, %v840
        %842 = vmatmul.bf16.gmra.mxu0 %v432
        %v843 = vpop.f32.mrf.mxu0
        %v844 = vadd.f32 0.0, %v843
        %v845 = vpop.f32.mrf.mxu0
        %v846 = vadd.f32 0.0, %v845
        %847 = vmatmul.bf16.gmra.mxu0 %v435
        %v848 = vpop.f32.mrf.mxu0
        %v849 = vadd.f32 0.0, %v848
        %v850 = vpop.f32.mrf.mxu0
        %v851 = vadd.f32 0.0, %v850
        %852 = vmatmul.bf16.gmra.mxu0 %v438
        %v853 = vpop.f32.mrf.mxu0
        %v854 = vadd.f32 0.0, %v853
        %v855 = vpop.f32.mrf.mxu0
        %v856 = vadd.f32 0.0, %v855
        %857 = vmatmul.bf16.gmra.mxu0 %v441
        %v858 = vpop.f32.mrf.mxu0
        %v859 = vadd.f32 0.0, %v858
        %v860 = vpop.f32.mrf.mxu0
        %v861 = vadd.f32 0.0, %v860
        %862 = vmatmul.bf16.gmra.mxu0 %v444
        %v863 = vpop.f32.mrf.mxu0
        %v864 = vadd.f32 0.0, %v863
        %v865 = vpop.f32.mrf.mxu0
        %v866 = vadd.f32 0.0, %v865
        %867 = vmatmul.bf16.gmra.mxu0 %v447
        %v868 = vpop.f32.mrf.mxu0
        %v869 = vadd.f32 0.0, %v868
        %v870 = vpop.f32.mrf.mxu0
        %v871 = vadd.f32 0.0, %v870
        %872 = vmatmul.bf16.gmra.mxu0 %v450
        %v873 = vpop.f32.mrf.mxu0
        %v874 = vadd.f32 0.0, %v873
        %v875 = vpop.f32.mrf.mxu0
        %v876 = vadd.f32 0.0, %v875
        %877 = vdwg.mxu0
        %v878 = vpack.c.bf16 %v799, %v799
        %v879 = vpack.c.bf16 %v801, %v801
        %v880 = vpack.c.bf16 %v804, %v804
        %v881 = vpack.c.bf16 %v806, %v806
        %v882 = vpack.c.bf16 %v809, %v809
        %v883 = vpack.c.bf16 %v811, %v811
        %v884 = vpack.c.bf16 %v814, %v814
        %v885 = vpack.c.bf16 %v816, %v816
        %v886 = vpack.c.bf16 %v819, %v819
        %v887 = vpack.c.bf16 %v821, %v821
        %v888 = vpack.c.bf16 %v824, %v824
        %v889 = vpack.c.bf16 %v826, %v826
        %v890 = vpack.c.bf16 %v829, %v829
        %v891 = vpack.c.bf16 %v831, %v831
        %v892 = vpack.c.bf16 %v834, %v834
        %v893 = vpack.c.bf16 %v836, %v836
        %v894 = vpack.c.bf16 %v839, %v839
        %v895 = vpack.c.bf16 %v841, %v841
        %v896 = vpack.c.bf16 %v844, %v844
        %v897 = vpack.c.bf16 %v846, %v846
        %v898 = vpack.c.bf16 %v849, %v849
        %v899 = vpack.c.bf16 %v851, %v851
        %v900 = vpack.c.bf16 %v854, %v854
        %v901 = vpack.c.bf16 %v856, %v856
        %v902 = vpack.c.bf16 %v859, %v859
        %v903 = vpack.c.bf16 %v861, %v861
        %v904 = vpack.c.bf16 %v864, %v864
        %v905 = vpack.c.bf16 %v866, %v866
        %v906 = vpack.c.bf16 %v869, %v869
        %v907 = vpack.c.bf16 %v871, %v871
        %v908 = vpack.c.bf16 %v874, %v874
        %v909 = vpack.c.bf16 %v876, %v876
        %vm910 = vcmask 257024
        %911 = vst.msk [vmem:[%s287] sm:$0xf] %vm910, %v878
        %912 = vst.msk [vmem:[%s287 + $0x4] sm:$0xf] %vm910, %v879
        %913 = vst.msk [vmem:[%s287 + $0x8] sm:$0xf] %vm910, %v880
        %914 = vst.msk [vmem:[%s287 + $0xc] sm:$0xf] %vm910, %v881
        %915 = vst.msk [vmem:[%s287 + $0x10] sm:$0xf] %vm910, %v882
        %916 = vst.msk [vmem:[%s287 + $0x14] sm:$0xf] %vm910, %v883
        %917 = vst.msk [vmem:[%s287 + $0x18] sm:$0xf] %vm910, %v884
        %918 = vst.msk [vmem:[%s287 + $0x1c] sm:$0xf] %vm910, %v885
        %919 = vst.msk [vmem:[%s287 + $0x20] sm:$0xf] %vm910, %v886
        %920 = vst.msk [vmem:[%s287 + $0x24] sm:$0xf] %vm910, %v887
        %921 = vst.msk [vmem:[%s287 + $0x28] sm:$0xf] %vm910, %v888
        %922 = vst.msk [vmem:[%s287 + $0x2c] sm:$0xf] %vm910, %v889
        %923 = vst.msk [vmem:[%s287 + $0x30] sm:$0xf] %vm910, %v890
        %924 = vst.msk [vmem:[%s287 + $0x34] sm:$0xf] %vm910, %v891
        %925 = vst.msk [vmem:[%s287 + $0x38] sm:$0xf] %vm910, %v892
        %926 = vst.msk [vmem:[%s287 + $0x3c] sm:$0xf] %vm910, %v893
        %927 = vst.msk [vmem:[%s287 + $0x40] sm:$0xf] %vm910, %v894
        %928 = vst.msk [vmem:[%s287 + $0x44] sm:$0xf] %vm910, %v895
        %929 = vst.msk [vmem:[%s287 + $0x48] sm:$0xf] %vm910, %v896
        %930 = vst.msk [vmem:[%s287 + $0x4c] sm:$0xf] %vm910, %v897
        %931 = vst.msk [vmem:[%s287 + $0x50] sm:$0xf] %vm910, %v898
        %932 = vst.msk [vmem:[%s287 + $0x54] sm:$0xf] %vm910, %v899
        %933 = vst.msk [vmem:[%s287 + $0x58] sm:$0xf] %vm910, %v900
        %934 = vst.msk [vmem:[%s287 + $0x5c] sm:$0xf] %vm910, %v901
        %935 = vst.msk [vmem:[%s287 + $0x60] sm:$0xf] %vm910, %v902
        %936 = vst.msk [vmem:[%s287 + $0x64] sm:$0xf] %vm910, %v903
        %937 = vst.msk [vmem:[%s287 + $0x68] sm:$0xf] %vm910, %v904
        %938 = vst.msk [vmem:[%s287 + $0x6c] sm:$0xf] %vm910, %v905
        %939 = vst.msk [vmem:[%s287 + $0x70] sm:$0xf] %vm910, %v906
        %940 = vst.msk [vmem:[%s287 + $0x74] sm:$0xf] %vm910, %v907
        %941 = vst.msk [vmem:[%s287 + $0x78] sm:$0xf] %vm910, %v908
        %942 = vst.msk [vmem:[%s287 + $0x7c] sm:$0xf] %vm910, %v909
        %vm943 = vcmask 261120
        %v944 = vsel %vm943, %v799, 0.0
        %v945 = vsel %vm943, %v801, 0.0
        %v946 = vadd.f32 %v944, %v945
        %v947 = vsel %vm943, %v804, 0.0
        %v948 = vadd.f32 %v946, %v947
        %v949 = vsel %vm943, %v806, 0.0
        %v950 = vadd.f32 %v948, %v949
        %v951 = vsel %vm943, %v809, 0.0
        %v952 = vadd.f32 %v950, %v951
        %v953 = vsel %vm943, %v811, 0.0
        %v954 = vadd.f32 %v952, %v953
        %v955 = vsel %vm943, %v814, 0.0
        %v956 = vadd.f32 %v954, %v955
        %v957 = vsel %vm943, %v816, 0.0
        %v958 = vadd.f32 %v956, %v957
        %v959 = vsel %vm943, %v819, 0.0
        %v960 = vadd.f32 %v958, %v959
        %v961 = vsel %vm943, %v821, 0.0
        %v962 = vadd.f32 %v960, %v961
        %v963 = vsel %vm943, %v824, 0.0
        %v964 = vadd.f32 %v962, %v963
        %v965 = vsel %vm943, %v826, 0.0
        %v966 = vadd.f32 %v964, %v965
        %v967 = vsel %vm943, %v829, 0.0
        %v968 = vadd.f32 %v966, %v967
        %v969 = vsel %vm943, %v831, 0.0
        %v970 = vadd.f32 %v968, %v969
        %v971 = vsel %vm943, %v834, 0.0
        %v972 = vadd.f32 %v970, %v971
        %v973 = vsel %vm943, %v836, 0.0
        %v974 = vadd.f32 %v972, %v973
        %v975 = vsel %vm943, %v839, 0.0
        %v976 = vadd.f32 %v974, %v975
        %v977 = vsel %vm943, %v841, 0.0
        %v978 = vadd.f32 %v976, %v977
        %v979 = vsel %vm943, %v844, 0.0
        %v980 = vadd.f32 %v978, %v979
        %v981 = vsel %vm943, %v846, 0.0
        %v982 = vadd.f32 %v980, %v981
        %v983 = vsel %vm943, %v849, 0.0
        %v984 = vadd.f32 %v982, %v983
        %v985 = vsel %vm943, %v851, 0.0
        %v986 = vadd.f32 %v984, %v985
        %v987 = vsel %vm943, %v854, 0.0
        %v988 = vadd.f32 %v986, %v987
        %v989 = vsel %vm943, %v856, 0.0
        %v990 = vadd.f32 %v988, %v989
        %v991 = vsel %vm943, %v859, 0.0
        %v992 = vadd.f32 %v990, %v991
        %v993 = vsel %vm943, %v861, 0.0
        %v994 = vadd.f32 %v992, %v993
        %v995 = vsel %vm943, %v864, 0.0
        %v996 = vadd.f32 %v994, %v995
        %v997 = vsel %vm943, %v866, 0.0
        %v998 = vadd.f32 %v996, %v997
        %v999 = vsel %vm943, %v869, 0.0
        %v1000 = vadd.f32 %v998, %v999
        %v1001 = vsel %vm943, %v871, 0.0
        %v1002 = vadd.f32 %v1000, %v1001
        %v1003 = vsel %vm943, %v874, 0.0
        %v1004 = vadd.f32 %v1002, %v1003
        %v1005 = vsel %vm943, %v876, 0.0
        %v1006 = vadd.f32 %v1004, %v1005
        %v1007 = vrot.slane %v1006, 4
        %v1008 = vadd.f32 %v1006, %v1007
        %v1009 = vrot.slane %v1008, 2
        %v1010 = vadd.f32 %v1008, %v1009
        %v1011 = vrot.slane %v1010, 1
        %v1012 = vadd.f32 %v1010, %v1011
        %v1013 = vmul.f32 %v799, %v799
        %v1014 = vmul.f32 %v801, %v801
        %v1015 = vmul.f32 %v804, %v804
        %v1016 = vmul.f32 %v806, %v806
        %v1017 = vmul.f32 %v809, %v809
        %v1018 = vmul.f32 %v811, %v811
        %v1019 = vmul.f32 %v814, %v814
        %v1020 = vmul.f32 %v816, %v816
        %v1021 = vmul.f32 %v819, %v819
        %v1022 = vmul.f32 %v821, %v821
        %v1023 = vmul.f32 %v824, %v824
        %v1024 = vmul.f32 %v826, %v826
        %v1025 = vmul.f32 %v829, %v829
        %v1026 = vmul.f32 %v831, %v831
        %v1027 = vmul.f32 %v834, %v834
        %v1028 = vmul.f32 %v836, %v836
        %v1029 = vmul.f32 %v839, %v839
        %v1030 = vmul.f32 %v841, %v841
        %v1031 = vmul.f32 %v844, %v844
        %v1032 = vmul.f32 %v846, %v846
        %v1033 = vmul.f32 %v849, %v849
        %v1034 = vmul.f32 %v851, %v851
        %v1035 = vmul.f32 %v854, %v854
        %v1036 = vmul.f32 %v856, %v856
        %v1037 = vmul.f32 %v859, %v859
        %v1038 = vmul.f32 %v861, %v861
        %v1039 = vmul.f32 %v864, %v864
        %v1040 = vmul.f32 %v866, %v866
        %v1041 = vmul.f32 %v869, %v869
        %v1042 = vmul.f32 %v871, %v871
        %v1043 = vmul.f32 %v874, %v874
        %v1044 = vmul.f32 %v876, %v876
        %v1045 = vsel %vm943, %v1013, 0.0
        %v1046 = vsel %vm943, %v1014, 0.0
        %v1047 = vadd.f32 %v1045, %v1046
        %v1048 = vsel %vm943, %v1015, 0.0
        %v1049 = vadd.f32 %v1047, %v1048
        %v1050 = vsel %vm943, %v1016, 0.0
        %v1051 = vadd.f32 %v1049, %v1050
        %v1052 = vsel %vm943, %v1017, 0.0
        %v1053 = vadd.f32 %v1051, %v1052
        %v1054 = vsel %vm943, %v1018, 0.0
        %v1055 = vadd.f32 %v1053, %v1054
        %v1056 = vsel %vm943, %v1019, 0.0
        %v1057 = vadd.f32 %v1055, %v1056
        %v1058 = vsel %vm943, %v1020, 0.0
        %v1059 = vadd.f32 %v1057, %v1058
        %v1060 = vsel %vm943, %v1021, 0.0
        %v1061 = vadd.f32 %v1059, %v1060
        %v1062 = vsel %vm943, %v1022, 0.0
        %v1063 = vadd.f32 %v1061, %v1062
        %v1064 = vsel %vm943, %v1023, 0.0
        %v1065 = vadd.f32 %v1063, %v1064
        %v1066 = vsel %vm943, %v1024, 0.0
        %v1067 = vadd.f32 %v1065, %v1066
        %v1068 = vsel %vm943, %v1025, 0.0
        %v1069 = vadd.f32 %v1067, %v1068
        %v1070 = vsel %vm943, %v1026, 0.0
        %v1071 = vadd.f32 %v1069, %v1070
        %v1072 = vsel %vm943, %v1027, 0.0
        %v1073 = vadd.f32 %v1071, %v1072
        %v1074 = vsel %vm943, %v1028, 0.0
        %v1075 = vadd.f32 %v1073, %v1074
        %v1076 = vsel %vm943, %v1029, 0.0
        %v1077 = vadd.f32 %v1075, %v1076
        %v1078 = vsel %vm943, %v1030, 0.0
        %v1079 = vadd.f32 %v1077, %v1078
        %v1080 = vsel %vm943, %v1031, 0.0
        %v1081 = vadd.f32 %v1079, %v1080
        %v1082 = vsel %vm943, %v1032, 0.0
        %v1083 = vadd.f32 %v1081, %v1082
        %v1084 = vsel %vm943, %v1033, 0.0
        %v1085 = vadd.f32 %v1083, %v1084
        %v1086 = vsel %vm943, %v1034, 0.0
        %v1087 = vadd.f32 %v1085, %v1086
        %v1088 = vsel %vm943, %v1035, 0.0
        %v1089 = vadd.f32 %v1087, %v1088
        %v1090 = vsel %vm943, %v1036, 0.0
        %v1091 = vadd.f32 %v1089, %v1090
        %v1092 = vsel %vm943, %v1037, 0.0
        %v1093 = vadd.f32 %v1091, %v1092
        %v1094 = vsel %vm943, %v1038, 0.0
        %v1095 = vadd.f32 %v1093, %v1094
        %v1096 = vsel %vm943, %v1039, 0.0
        %v1097 = vadd.f32 %v1095, %v1096
        %v1098 = vsel %vm943, %v1040, 0.0
        %v1099 = vadd.f32 %v1097, %v1098
        %v1100 = vsel %vm943, %v1041, 0.0
        %v1101 = vadd.f32 %v1099, %v1100
        %v1102 = vsel %vm943, %v1042, 0.0
        %v1103 = vadd.f32 %v1101, %v1102
        %v1104 = vsel %vm943, %v1043, 0.0
        %v1105 = vadd.f32 %v1103, %v1104
        %v1106 = vsel %vm943, %v1044, 0.0
        %v1107 = vadd.f32 %v1105, %v1106
        %v1108 = vrot.slane %v1107, 4
        %v1109 = vadd.f32 %v1107, %v1108
        %v1110 = vrot.slane %v1109, 2
        %v1111 = vadd.f32 %v1109, %v1110
        %v1112 = vrot.slane %v1111, 1
        %v1113 = vadd.f32 %v1111, %v1112
        %v1114 = vsel %vm781, %v1012, %v1113
        %vm1115 = vcmask 254976
        %1116 = vst.msk [vmem:[%s270] sm:$0x3] %vm1115, %v1114
        %s1117 = smul.u32 32, %s24
        %p1118 = scmp.lt.s32.totalorder %s1117, 63
        %s1119 = scalar_select %p1118, %s1117, 63
        %s1120 = smul.addr %s1119, 4
        %s1121 = scalar_lea.vmem %s3, %s1120
        %s1122 = smul.u32 32, %s24
        %p1123 = scmp.lt.s32.totalorder %s1122, 63
        %s1124 = scalar_select %p1123, %s1122, 63
        %s1125 = smul.addr %s1124, 4
        %s1126 = scalar_lea.vmem %s4, %s1125
        %s1127 = sand.u32 %s152, 1
        %s1128 = scalar_lea.sflag [#allocation3], %s1127
        %s1129 = sand.u32 %s152, 1
        %s1130 = smul.addr %s1129, 2
        %s1131 = scalar_lea.vmem [#allocation2], %s1130
        %s1132 = sand.u32 %s178, 1
        %s1133 = scalar_lea.sflag [#allocation5], %s1132
        %s1134 = sand.u32 %s178, 1
        %s1135 = smul.addr %s1134, 2
        %s1136 = scalar_lea.vmem [#allocation4], %s1135
        // Predicated region
        $region33: #{tpu_custom_call.1} parent=31 // pred_check
          %p1137 = pneg %p110
        $region34: #{tpu_custom_call.1} parent=31 // pred_check_branch
          %1139 = sbr.rel (%p1137) target = $region36
        $region35: #{tpu_custom_call.1} parent=31 // pred_region
          %s1140 = smul.u32 32, %s24
        $region36: #{tpu_custom_call.1} parent=31 // pred_fallthru
          _
        // Predicated region
        $region37: #{tpu_custom_call.1} parent=31 // pred_check
          %p1141 = pneg %p136
        $region38: #{tpu_custom_call.1} parent=31 // pred_check_branch
          %1143 = sbr.rel (%p1141) target = $region40
        $region39: #{tpu_custom_call.1} parent=31 // pred_region
          %s1144 = smul.u32 32, %s24
        $region40: #{tpu_custom_call.1} parent=31 // pred_fallthru
          _
        // Predicated region
        $region41: #{tpu_custom_call.1} parent=31 // pred_check
          %p1145 = pneg %p162
        $region42: #{tpu_custom_call.1} parent=31 // pred_check_branch
          %1147 = sbr.rel (%p1145) target = $region44
        $region43: #{tpu_custom_call.1} parent=31 // pred_region
          %1149 = vsyncadd %s1128, 0
          %s1150 = smul.addr %s24, 2
          %s1151 = scalar_lea.hbm %s5, %s1150
          %s1153 = sshll.u32 %s1131, 4
          %s1154 = int_to_ptr.vmem [resolvable:$true] %s1153
          %s1155 = sshll.u32 %s1151, 4
          %s1156 = int_to_ptr.hbm [resolvable:$true] %s1155
          %1158 = dma.vmem_to_hbm [thread:$0]  %s1154, 32, %s1156, %s1128
        $region44: #{tpu_custom_call.1} parent=31 // pred_fallthru
          _
        // Predicated region
        $region45: #{tpu_custom_call.1} parent=31 // pred_check
          %p1159 = pneg %p188
        $region46: #{tpu_custom_call.1} parent=31 // pred_check_branch
          %1161 = sbr.rel (%p1159) target = $region48
        $region47: #{tpu_custom_call.1} parent=31 // pred_region
          %1163 = vsyncadd %s1133, 0
          %s1164 = smul.addr %s24, 2
          %s1165 = scalar_lea.hbm %s6, %s1164
          %s1167 = sshll.u32 %s1136, 4
          %s1168 = int_to_ptr.vmem [resolvable:$true] %s1167
          %s1169 = sshll.u32 %s1165, 4
          %s1170 = int_to_ptr.hbm [resolvable:$true] %s1169
          %1172 = dma.vmem_to_hbm [thread:$0]  %s1168, 32, %s1170, %s1133
        $region48: #{tpu_custom_call.1} parent=31 // pred_fallthru
          _
      $region32: #{tpu_custom_call.1} parent=5 // pred_fallthru
        _
      %p1173 = scmp.le.s32.totalorder 2, %s19
      // Predicated region
      $region49: #{tpu_custom_call.1} parent=5 // pred_check
        %p1174 = pneg %p1173
      $region50: #{tpu_custom_call.1} parent=5 // pred_check_branch
        %1176 = sbr.rel (%p1174) target = $region52
      $region51: #{tpu_custom_call.1} parent=5 // pred_region
        %s1177 = ssub.s32 %s19, 2
        // Predicated region
        $region53: #{tpu_custom_call.1} parent=51 // pred_check
          %p1178 = pneg %p116
        $region54: #{tpu_custom_call.1} parent=51 // pred_check_branch
          %1180 = sbr.rel (%p1178) target = $region56
        $region55: #{tpu_custom_call.1} parent=51 // pred_region
          %s1181 = smul.u32 32, %s25
          %p1182 = scmp.lt.s32.totalorder %s1181, 63
          %s1183 = scalar_select %p1182, %s1181, 63
          %s1184 = smul.addr %s1183, 4
          %s1185 = scalar_lea.vmem %s3, %s1184
        $region56: #{tpu_custom_call.1} parent=51 // pred_fallthru
          _
        // Predicated region
        $region57: #{tpu_custom_call.1} parent=51 // pred_check
          %p1186 = pneg %p142
        $region58: #{tpu_custom_call.1} parent=51 // pred_check_branch
          %1188 = sbr.rel (%p1186) target = $region60
        $region59: #{tpu_custom_call.1} parent=51 // pred_region
          %s1189 = smul.u32 32, %s25
          %p1190 = scmp.lt.s32.totalorder %s1189, 63
          %s1191 = scalar_select %p1190, %s1189, 63
          %s1192 = smul.addr %s1191, 4
          %s1193 = scalar_lea.vmem %s4, %s1192
        $region60: #{tpu_custom_call.1} parent=51 // pred_fallthru
          _
        // Predicated region
        $region61: #{tpu_custom_call.1} parent=51 // pred_check
          %p1194 = pneg %p168
        $region62: #{tpu_custom_call.1} parent=51 // pred_check_branch
          %1196 = sbr.rel (%p1194) target = $region64
        $region63: #{tpu_custom_call.1} parent=51 // pred_region
          %s1197 = sand.u32 %s153, 1
          %s1198 = scalar_lea.sflag [#allocation3], %s1197
          %s1199 = sand.u32 %s153, 1
          %s1200 = smul.addr %s1199, 2
          %s1201 = scalar_lea.vmem [#allocation2], %s1200
          %1203 = dma.done %s1198, 32
        $region64: #{tpu_custom_call.1} parent=51 // pred_fallthru
          _
        // Predicated region
        $region65: #{tpu_custom_call.1} parent=51 // pred_check
          %p1204 = pneg %p194
        $region66: #{tpu_custom_call.1} parent=51 // pred_check_branch
          %1206 = sbr.rel (%p1204) target = $region68
        $region67: #{tpu_custom_call.1} parent=51 // pred_region
          %s1207 = sand.u32 %s179, 1
          %s1208 = scalar_lea.sflag [#allocation5], %s1207
          %s1209 = sand.u32 %s179, 1
          %s1210 = smul.addr %s1209, 2
          %s1211 = scalar_lea.vmem [#allocation4], %s1210
          %1213 = dma.done %s1208, 32
        $region68: #{tpu_custom_call.1} parent=51 // pred_fallthru
          _
      $region52: #{tpu_custom_call.1} parent=5 // pred_fallthru
        _
    $region6: #{tpu_custom_call.1} parent=1 // loop_footer
      %s23 = sadd.s32 1, %s19
    $region7: #{tpu_custom_call.1} parent=1 // loop_footer_branch
      %18 = sbr.rel target = $region3
    $region8: #{tpu_custom_call.1} parent=1 // loop_exit
      _
    %1214 = vsyncpa [#allocation3], 1
    %s1215 = scalar_lea.sflag [#allocation3], 1
    %1216 = vsyncpa %s1215, 1
    %1217 = vsyncpa [#allocation5], 1
    %s1218 = scalar_lea.sflag [#allocation5], 1
    %1219 = vsyncpa %s1218, 1

</llo_original>
